<compile_context>
chip_gen: v7x
topology: tpu7x:2x2x1
jax: 0.10.0
libtpu: 0.0.40
codegen_flags: <defaults>
</compile_context>

<pallas_src>
import jax
import jax.numpy as jnp
from jax import lax
from jax.experimental import pallas as pl
from jax.experimental.pallas import tpu as pltpu


def _round_up(x, m):
    return ((x + m - 1) // m) * m


def _linear_kernel_single(x_ref, w_ref, b_ref, o_ref):
    # K fits in a single tile: no scratch accumulator needed.
    # x_ref: (tm, K), w_ref: (tn, K) [PyTorch layout], b_ref: (1, tn), o_ref: (tm, tn)
    acc = lax.dot_general(
        x_ref[...],
        w_ref[...],
        dimension_numbers=(((1,), (1,)), ((), ())),
        preferred_element_type=jnp.float32,
    )
    o_ref[...] = (acc + b_ref[...].astype(jnp.float32)).astype(o_ref.dtype)


def _linear_kernel_acc(x_ref, w_ref, b_ref, o_ref, acc_ref):
    # K reduction across the last grid axis with an f32 VMEM accumulator.
    # x_ref: (tm, tk), w_ref: (tn, tk), b_ref: (1, tn), o_ref/acc_ref: (tm, tn)
    k = pl.program_id(2)

    @pl.when(k == 0)
    def _init():
        acc_ref[...] = jnp.zeros_like(acc_ref)

    acc_ref[...] += lax.dot_general(
        x_ref[...],
        w_ref[...],
        dimension_numbers=(((1,), (1,)), ((), ())),
        preferred_element_type=jnp.float32,
    )

    @pl.when(k == pl.num_programs(2) - 1)
    def _finalize():
        o_ref[...] = (acc_ref[...] + b_ref[...].astype(jnp.float32)).astype(o_ref.dtype)


def mlstm_block_forward(x, weight, bias, *, tm=None, tn=None, tk=None):
    """Forward pass of mLSTMBlock: y = x @ weight.T + bias.

    x:      [..., input_size]
    weight: [hidden_size, input_size]   (PyTorch nn.Linear convention, NOT transposed)
    bias:   [hidden_size]
    """
    n_out, k_in = weight.shape
    orig_shape = x.shape
    assert orig_shape[-1] == k_in

    x2d = x.reshape(-1, k_in)
    m = x2d.shape[0]

    # ---- tile selection: lane axes multiple of 128, sublane multiple of 8/16 ----
    sublane = 16 if x.dtype == jnp.bfloat16 else 8
    if tm is None:
        tm = min(256, _round_up(m, sublane))
    if tk is None:
        tk = min(512, _round_up(k_in, 128))
    if tn is None:
        tn = min(512, _round_up(n_out, 128))

    m_p = _round_up(m, tm)
    k_p = _round_up(k_in, tk)
    n_p = _round_up(n_out, tn)

    # ---- zero-pad to tile multiples (does not change the matmul result) ----
    if (m_p, k_p) != (m, k_in):
        x2d = jnp.pad(x2d, ((0, m_p - m), (0, k_p - k_in)))
    w = weight
    if (n_p, k_p) != (n_out, k_in):
        w = jnp.pad(w, ((0, n_p - n_out), (0, k_p - k_in)))
    b2d = bias.reshape(1, n_out)
    if n_p != n_out:
        b2d = jnp.pad(b2d, ((0, 0), (0, n_p - n_out)))

    k_steps = k_p // tk

    itemsize = jnp.dtype(x.dtype).itemsize
    cost = pl.CostEstimate(
        flops=2 * m_p * k_p * n_p,
        transcendentals=0,
        bytes_accessed=(x2d.size + w.size + b2d.size + m_p * n_p) * itemsize,
    )

    if k_steps == 1:
        # Single K tile: no accumulator scratch, no reduction axis.
        grid = (m_p // tm, n_p // tn)
        out = pl.pallas_call(
            _linear_kernel_single,
            out_shape=jax.ShapeDtypeStruct((m_p, n_p), x.dtype),
            grid_spec=pltpu.PrefetchScalarGridSpec(
                num_scalar_prefetch=0,
                grid=grid,
                in_specs=[
                    pl.BlockSpec((tm, k_p), lambda i, j: (i, 0)),   # x tile
                    pl.BlockSpec((tn, k_p), lambda i, j: (j, 0)),   # weight tile (N, K)
                    pl.BlockSpec((1, tn), lambda i, j: (0, j)),     # bias tile
                ],
                out_specs=pl.BlockSpec((tm, tn), lambda i, j: (i, j)),
            ),
            compiler_params=pltpu.CompilerParams(
                dimension_semantics=("parallel", "parallel"),
            ),
            cost_estimate=cost,
        )(x2d, w, b2d)
    else:
        # K reduction across the last (arbitrary) grid axis.
        grid = (m_p // tm, n_p // tn, k_steps)
        out = pl.pallas_call(
            _linear_kernel_acc,
            out_shape=jax.ShapeDtypeStruct((m_p, n_p), x.dtype),
            grid_spec=pltpu.PrefetchScalarGridSpec(
                num_scalar_prefetch=0,
                grid=grid,
                in_specs=[
                    pl.BlockSpec((tm, tk), lambda i, j, k: (i, k)),  # x tile
                    pl.BlockSpec((tn, tk), lambda i, j, k: (j, k)),  # weight tile (N, K)
                    pl.BlockSpec((1, tn), lambda i, j, k: (0, j)),   # bias tile
                ],
                out_specs=pl.BlockSpec((tm, tn), lambda i, j, k: (i, j)),
                scratch_shapes=[pltpu.VMEM((tm, tn), jnp.float32)],
            ),
            compiler_params=pltpu.CompilerParams(
                dimension_semantics=("parallel", "parallel", "arbitrary"),
            ),
            cost_estimate=cost,
        )(x2d, w, b2d)

    out = out[:m, :n_out]
    return out.reshape(*orig_shape[:-1], n_out)


def init_mlstm_block_params(key, input_size, hidden_size, dtype=jnp.float32):
    """Deterministic init matching nn.Linear's uniform(-1/sqrt(in), 1/sqrt(in))."""
    k_w, k_b = jax.random.split(key)
    bound = 1.0 / (input_size ** 0.5)
    weight = jax.random.uniform(
        k_w, (hidden_size, input_size), dtype=dtype, minval=-bound, maxval=bound)
    bias = jax.random.uniform(
        k_b, (hidden_size,), dtype=dtype, minval=-bound, maxval=bound)
    return weight, bias


if __name__ == "__main__":
    key = jax.random.PRNGKey(0)

    # --- primary check: small shapes matching the module's toy usage ---
    batch, seq, input_size, hidden_size = 2, 8, 32, 32
    k_x, k_p, k_x2, k_p2 = jax.random.split(key, 4)

    x = jax.random.normal(k_x, (batch, seq, input_size), dtype=jnp.float32)
    weight, bias = init_mlstm_block_params(k_p, input_size, hidden_size)

    y = mlstm_block_forward(x, weight, bias)
    y = jax.block_until_ready(y)

    y_ref = x @ weight.T + bias
    assert y.shape == (batch, seq, hidden_size)
    assert jnp.allclose(y, y_ref, atol=1e-5, rtol=1e-5)

    # --- secondary check: exercises K-reduction path + N padding, still small ---
    in2, hid2 = 256, 160
    x2 = jax.random.normal(k_x2, (batch, seq, in2), dtype=jnp.float32)
    w2, b2 = init_mlstm_block_params(k_p2, in2, hid2)
    y2 = jax.block_until_ready(mlstm_block_forward(x2, w2, b2, tk=128))
    y2_ref = x2 @ w2.T + b2
    assert y2.shape == (batch, seq, hid2)
    assert jnp.allclose(y2, y2_ref, atol=1e-4, rtol=1e-4)

    print("KERNEL_OK")
</pallas_src>

<mosaic_0001>
module attributes {stable_mosaic.version = 11 : i64} {
  func.func @_linear_kernel_single(%arg0: i32, %arg1: i32, %arg2: memref<16x128xf32, #tpu.memory_space<vmem>>, %arg3: memref<128x128xf32, #tpu.memory_space<vmem>>, %arg4: memref<1x128xf32, #tpu.memory_space<vmem>>, %arg5: memref<16x128xf32, #tpu.memory_space<vmem>>) attributes {dimension_semantics = [#tpu.dimension_semantics<parallel>, #tpu.dimension_semantics<parallel>], iteration_bounds = array<i64: 1, 1>, scalar_prefetch = 0 : i64, scratch_operands = 0 : i64, tpu.core_type = #tpu.core_type<tc>, window_params = [{transform_indices = @transform_0, window_bounds = array<i64: 16, 128>}, {transform_indices = @transform_1, window_bounds = array<i64: 128, 128>}, {transform_indices = @transform_2, window_bounds = array<i64: 1, 128>}, {transform_indices = @transform_3, window_bounds = array<i64: 16, 128>}]} {
    %c0 = arith.constant 0 : index
    %c0_0 = arith.constant 0 : index
    %0 = vector.load %arg2[%c0, %c0_0] : memref<16x128xf32, #tpu.memory_space<vmem>>, vector<16x128xf32>
    %c0_1 = arith.constant 0 : index
    %c0_2 = arith.constant 0 : index
    %1 = vector.load %arg3[%c0_1, %c0_2] : memref<128x128xf32, #tpu.memory_space<vmem>>, vector<128x128xf32>
    %cst = arith.constant dense<0.000000e+00> : vector<16x128xf32>
    %2 = tpu.matmul %0, %1, %cst {dimension_numbers = #tpu.dot_dimension_numbers<[1], [1], [0], [0], [0, 0, 1, 0], [], []>} : vector<16x128xf32>, vector<128x128xf32>, vector<16x128xf32> -> vector<16x128xf32>
    %c0_3 = arith.constant 0 : index
    %c0_4 = arith.constant 0 : index
    %3 = vector.load %arg4[%c0_3, %c0_4] : memref<1x128xf32, #tpu.memory_space<vmem>>, vector<1x128xf32>
    %4 = vector.broadcast %3 : vector<1x128xf32> to vector<16x128xf32>
    %5 = arith.addf %2, %4 : vector<16x128xf32>
    %c0_5 = arith.constant 0 : index
    %c0_6 = arith.constant 0 : index
    %6 = vector.load %arg5[%c0_5, %c0_6] : memref<16x128xf32, #tpu.memory_space<vmem>>, vector<16x128xf32>
    tpu.vector_store %arg5[%c0_5, %c0_6], %5 {strides = array<i32>} : memref<16x128xf32, #tpu.memory_space<vmem>>, vector<16x128xf32>,
    return
  }
  func.func @transform_0(%arg0: i32, %arg1: i32) -> (i32, i32) {
    %c0_i32 = arith.constant 0 : i32
    %c0_i32_0 = arith.constant 0 : i32
    return %arg0, %c0_i32 : i32, i32
  }
  func.func @transform_1(%arg0: i32, %arg1: i32) -> (i32, i32) {
    %c0_i32 = arith.constant 0 : i32
    %c0_i32_0 = arith.constant 0 : i32
    return %arg1, %c0_i32 : i32, i32
  }
  func.func @transform_2(%arg0: i32, %arg1: i32) -> (i32, i32) {
    %c0_i32 = arith.constant 0 : i32
    %c0_i32_0 = arith.constant 0 : i32
    return %c0_i32, %arg1 : i32, i32
  }
  func.func @transform_3(%arg0: i32, %arg1: i32) -> (i32, i32) {
    %c0_i32 = arith.constant 0 : i32
    return %arg0, %arg1 : i32, i32
  }
}

</mosaic_0001>

<llo_original>
// kernel: tpu_custom_call.1
$region0: #{tpu_custom_call.1}
  #allocation0 [shape = 'u32[]', space=smem, size = 0x4, offset = 0x4, fixed_abs, tag = 'smem constant byte address 0x4 - core index']
  #allocation1 [shape = 'u32[144,128]{1,0:T(1,128)}', space=vmem, size = 0x12000, scoped, tag = 'internal scratch']
  %s0 = inlined_call_operand.hbm [shape: f32[16,128], index: 0, kind: input, shape index: {}]
  %s1 = inlined_call_operand.hbm [shape: f32[128,128], index: 1, kind: input, shape index: {}]
  %s2 = inlined_call_operand.vmem [shape: f32[1,128], index: 2, kind: input, shape index: {}]
  %s3 = inlined_call_operand.hbm [shape: f32[16,128], index: 3, kind: output, shape index: {}]
  %s4 = sld [smem:[#allocation0]]
  $region30: #{tpu_custom_call.1} parent=0
    _
  %s6 = ssub.s32 1, %s4
  %s7 = scalar_select 0, %s6, %s4
  $region1: #{tpu_custom_call.1} parent=0
    #allocation2 [shape = 'u8[8192]{0}', space=vmem, size = 0x2000, scoped, tag = 'input window, operand 0, single buffered']
    #allocation3 [shape = 's32[1]{0}', space=sflag, size = 0x4, scoped, tag = 'scoped memory for tpu_custom_call.1']
    #allocation4 [shape = 's32[1]{0}', space=sflag, size = 0x4, scoped, tag = 'scoped memory for tpu_custom_call.1']
    #allocation5 [shape = 'u8[65536]{0}', space=vmem, size = 0x10000, scoped, tag = 'input window, operand 1, single buffered']
    #allocation6 [shape = 's32[1]{0}', space=sflag, size = 0x4, scoped, tag = 'scoped memory for tpu_custom_call.1']
    #allocation7 [shape = 'u8[8192]{0}', space=vmem, size = 0x2000, scoped, tag = 'output window, operand 0, single buffered']
    %8 = vsyncpa [#allocation3], 0
    %9 = vsyncpa [#allocation6], 0
    %10 = vsyncpa [#allocation4], 0
    // Predicated region
    $region2: #{tpu_custom_call.1} parent=1 // pred_check
      _
    $region3: #{tpu_custom_call.1} parent=1 // pred_check_branch
      %12 = sbr.rel (0) target = $region5
    $region4: #{tpu_custom_call.1} parent=1 // pred_region
      %s14 = ssub.s32 256, 256
      %15 = vsyncadd [#allocation3], %s14
      %s16 = sshll.u32 [#allocation2], 4
      %s17 = int_to_ptr.vmem [resolvable:$true] %s16
      %22 = dma.hbm_to_vmem [thread:$0]  %s0, 256, %s17, [#allocation3], 128, 128, 8
    $region5: #{tpu_custom_call.1} parent=1 // pred_fallthru
      _
    // Predicated region
    $region6: #{tpu_custom_call.1} parent=1 // pred_check
      _
    $region7: #{tpu_custom_call.1} parent=1 // pred_check_branch
      %24 = sbr.rel (0) target = $region9
    $region8: #{tpu_custom_call.1} parent=1 // pred_region
      %s26 = ssub.s32 2048, 2048
      %27 = vsyncadd [#allocation6], %s26
      %s28 = sshll.u32 [#allocation5], 4
      %s29 = int_to_ptr.vmem [resolvable:$true] %s28
      %34 = dma.hbm_to_vmem [thread:$0]  %s1, 2048, %s29, [#allocation6], 128, 128, 8
    $region9: #{tpu_custom_call.1} parent=1 // pred_fallthru
      _
    // Predicated region
    $region10: #{tpu_custom_call.1} parent=1 // pred_check
      _
    $region11: #{tpu_custom_call.1} parent=1 // pred_check_branch
      %36 = sbr.rel (0) target = $region13
    $region12: #{tpu_custom_call.1} parent=1 // pred_region
      _
    $region13: #{tpu_custom_call.1} parent=1 // pred_fallthru
      _
    // Predicated region
    $region14: #{tpu_custom_call.1} parent=1 // pred_check
      _
    $region15: #{tpu_custom_call.1} parent=1 // pred_check_branch
      %38 = sbr.rel (0) target = $region17
    $region16: #{tpu_custom_call.1} parent=1 // pred_region
      %39 = dma.done [#allocation3], 256
    $region17: #{tpu_custom_call.1} parent=1 // pred_fallthru
      _
    // Predicated region
    $region18: #{tpu_custom_call.1} parent=1 // pred_check
      _
    $region19: #{tpu_custom_call.1} parent=1 // pred_check_branch
      %41 = sbr.rel (0) target = $region21
    $region20: #{tpu_custom_call.1} parent=1 // pred_region
      %42 = dma.done [#allocation6], 2048
    $region21: #{tpu_custom_call.1} parent=1 // pred_fallthru
      _
    %v43 = vld [vmem:[#allocation2] sm:$0xff]
    %v44 = vld [vmem:[#allocation2 + $0x8] sm:$0xff]
    %v45 = vld [vmem:[#allocation5] sm:$0xff]
    %v46 = vld [vmem:[#allocation5 + $0x8] sm:$0xff]
    %v47 = vld [vmem:[#allocation5 + $0x10] sm:$0xff]
    %v48 = vld [vmem:[#allocation5 + $0x18] sm:$0xff]
    %v49 = vld [vmem:[#allocation5 + $0x20] sm:$0xff]
    %v50 = vld [vmem:[#allocation5 + $0x28] sm:$0xff]
    %v51 = vld [vmem:[#allocation5 + $0x30] sm:$0xff]
    %v52 = vld [vmem:[#allocation5 + $0x38] sm:$0xff]
    %v53 = vld [vmem:[#allocation5 + $0x40] sm:$0xff]
    %v54 = vld [vmem:[#allocation5 + $0x48] sm:$0xff]
    %v55 = vld [vmem:[#allocation5 + $0x50] sm:$0xff]
    %v56 = vld [vmem:[#allocation5 + $0x58] sm:$0xff]
    %v57 = vld [vmem:[#allocation5 + $0x60] sm:$0xff]
    %v58 = vld [vmem:[#allocation5 + $0x68] sm:$0xff]
    %v59 = vld [vmem:[#allocation5 + $0x70] sm:$0xff]
    %v60 = vld [vmem:[#allocation5 + $0x78] sm:$0xff]
    %v61 = vld [vmem:[%s2] sm:$0x1]
    %v63 = vlaneseq
    %v64 = vshrl.u32 %v63, 7
    %v65 = vsub.s32 0, %v64
    %v66 = vrot.slane %v61, %v65
    %68 = vmatprep.subr.mxu0 0.0
    %69 = vmatpush1.xpose.msra.mxu0 %v45
    %70 = vmatprep.subr.mxu0 0.0
    %71 = vmatpush1.xpose.msra.mxu0 %v46
    %72 = vmatprep.subr.mxu0 0.0
    %73 = vmatpush1.xpose.msra.mxu0 %v47
    %74 = vmatprep.subr.mxu0 0.0
    %75 = vmatpush1.xpose.msra.mxu0 %v48
    %76 = vmatprep.subr.mxu0 0.0
    %77 = vmatpush1.xpose.msra.mxu0 %v49
    %78 = vmatprep.subr.mxu0 0.0
    %79 = vmatpush1.xpose.msra.mxu0 %v50
    %80 = vmatprep.subr.mxu0 0.0
    %81 = vmatpush1.xpose.msra.mxu0 %v51
    %82 = vmatprep.subr.mxu0 0.0
    %83 = vmatpush1.xpose.msra.mxu0 %v52
    %84 = vmatprep.subr.mxu0 0.0
    %85 = vmatpush1.xpose.msra.mxu0 %v53
    %86 = vmatprep.subr.mxu0 0.0
    %87 = vmatpush1.xpose.msra.mxu0 %v54
    %88 = vmatprep.subr.mxu0 0.0
    %89 = vmatpush1.xpose.msra.mxu0 %v55
    %90 = vmatprep.subr.mxu0 0.0
    %91 = vmatpush1.xpose.msra.mxu0 %v56
    %92 = vmatprep.subr.mxu0 0.0
    %93 = vmatpush1.xpose.msra.mxu0 %v57
    %94 = vmatprep.subr.mxu0 0.0
    %95 = vmatpush1.xpose.msra.mxu0 %v58
    %96 = vmatprep.subr.mxu0 0.0
    %97 = vmatpush1.xpose.msra.mxu0 %v59
    %98 = vmatprep.subr.mxu0 0.0
    %99 = vmatpush1.xpose.msra.mxu0 %v60
    %100 = vmatprep.subr.mxu0 0.0
    %101 = vmatpush1.xpose.msra.mxu0 0.0
    %102 = vmatprep.subr.mxu0 0.0
    %103 = vmatpush1.xpose.msra.mxu0 0.0
    %104 = vmatprep.subr.mxu0 0.0
    %105 = vmatpush1.xpose.msra.mxu0 0.0
    %106 = vmatprep.subr.mxu0 0.0
    %107 = vmatpush1.xpose.msra.mxu0 0.0
    %108 = vmatprep.subr.mxu0 0.0
    %109 = vmatpush1.xpose.msra.mxu0 0.0
    %110 = vmatprep.subr.mxu0 0.0
    %111 = vmatpush1.xpose.msra.mxu0 0.0
    %112 = vmatprep.subr.mxu0 0.0
    %113 = vmatpush1.xpose.msra.mxu0 0.0
    %114 = vmatprep.subr.mxu0 0.0
    %115 = vmatpush1.xpose.msra.mxu0 0.0
    %116 = vmatprep.subr.mxu0 0.0
    %117 = vmatpush1.xpose.msra.mxu0 0.0
    %118 = vmatprep.subr.mxu0 0.0
    %119 = vmatpush1.xpose.msra.mxu0 0.0
    %120 = vmatprep.subr.mxu0 0.0
    %121 = vmatpush1.xpose.msra.mxu0 0.0
    %122 = vmatprep.subr.mxu0 0.0
    %123 = vmatpush1.xpose.msra.mxu0 0.0
    %124 = vmatprep.subr.mxu0 0.0
    %125 = vmatpush1.xpose.msra.mxu0 0.0
    %126 = vmatprep.subr.mxu0 0.0
    %127 = vmatpush1.xpose.msra.mxu0 0.0
    %128 = vmatprep.subr.mxu0 0.0
    %129 = vmatpush1.xpose.msra.mxu0 0.0
    %130 = vmatprep.subr.mxu0 0.0
    %131 = vmatpush1.xpose.msra.mxu0 0.0
    %132 = vmatprep.mubr.f32.mxu0 0.0
    %133 = vmatmul.mubr.f32.gmra.mrb[0].mxu0 %v43
    %v134 = vpop.f32.mrb[0].mxu0
    %v135 = vadd.f32 %v66, %v134
    %v136 = vpop.f32.mrb[0].mxu0
    %137 = vmatprep.mubr.f32.mxu0 0.0
    %138 = vmatmul.mubr.f32.gmra.mrb[0].mxu0 %v44
    %v139 = vpop.f32.mrb[0].mxu0
    %v140 = vadd.f32 %v66, %v139
    %v141 = vpop.f32.mrb[0].mxu0
    %142 = vdwg.mxu0
    %143 = vst [vmem:[#allocation7] sm:$0xff] %v135
    %144 = vst [vmem:[#allocation7 + $0x8] sm:$0xff] %v140
    // Predicated region
    $region22: #{tpu_custom_call.1} parent=1 // pred_check
      _
    $region23: #{tpu_custom_call.1} parent=1 // pred_check_branch
      %146 = sbr.rel (0) target = $region25
    $region24: #{tpu_custom_call.1} parent=1 // pred_region
      %s148 = ssub.s32 256, 256
      %149 = vsyncadd [#allocation4], %s148
      %s150 = sshll.u32 [#allocation7], 4
      %s151 = int_to_ptr.vmem [resolvable:$true] %s150
      %156 = dma.vmem_to_hbm [thread:$0]  %s151, 256, %s3, [#allocation4], 128, 128, 8
    $region25: #{tpu_custom_call.1} parent=1 // pred_fallthru
      _
    // Predicated region
    $region26: #{tpu_custom_call.1} parent=1 // pred_check
      _
    $region27: #{tpu_custom_call.1} parent=1 // pred_check_branch
      %158 = sbr.rel (0) target = $region29
    $region28: #{tpu_custom_call.1} parent=1 // pred_region
      %159 = dma.done [#allocation4], 256
    $region29: #{tpu_custom_call.1} parent=1 // pred_fallthru
      _
    %160 = vsyncpa [#allocation3], 1
    %161 = vsyncpa [#allocation6], 1
    %162 = vsyncpa [#allocation4], 1

</llo_original>
